<compile_context>
chip_gen: v6e
topology: v6e:2x2x1
jax: 0.10.0
libtpu: 0.0.40
codegen_flags: <defaults>
</compile_context>

<pallas_src>
import functools

import jax
import jax.numpy as jnp
from jax.experimental import pallas as pl
from jax.experimental.pallas import tpu as pltpu

KH, KW = 4, 3
SH, SW = 2, 1
PAD = 1
BN_EPS = 1e-5
LEAKY_SLOPE = 0.01
LANE = 128


def _round_up(x, m):
    return (x + m - 1) // m * m


def _im2col(x_nchw):
    """Extract conv patches -> [N*OH*OW, C_in*KH*KW] (data rearrangement only)."""
    x = jnp.pad(x_nchw, ((0, 0), (0, 0), (PAD, PAD), (PAD, PAD)))
    n, c, hp, wp = x.shape
    oh = (hp - KH) // SH + 1
    ow = (wp - KW) // SW + 1
    taps = []
    for i in range(KH):
        for j in range(KW):
            taps.append(x[:, :, i:i + SH * oh:SH, j:j + SW * ow:SW])  # [N,C,OH,OW]
    patches = jnp.stack(taps, axis=-1)                # [N, C, OH, OW, KH*KW]
    patches = patches.transpose(0, 2, 3, 1, 4)        # [N, OH, OW, C, KH*KW]
    patches = patches.reshape(n * oh * ow, c * KH * KW)
    return patches, oh, ow


def _conv_stats_kernel(p_ref, w_ref, y_ref, stats_ref):
    """Conv tile (MXU matmul, f32 acc) + per-tile partial BN statistics."""
    y = jnp.dot(p_ref[...], w_ref[...], preferred_element_type=jnp.float32)
    y_ref[...] = y
    # Single-pass partial stats: per-channel sum and sum-of-squares over rows.
    s = jnp.sum(y, axis=0, keepdims=True)          # [1, C_pad]
    ss = jnp.sum(y * y, axis=0, keepdims=True)     # [1, C_pad]
    c = stats_ref.shape[-1]
    row = jax.lax.broadcasted_iota(jnp.int32, (8, c), 0)
    stats = jnp.where(row == 0, s, jnp.where(row == 1, ss, 0.0))
    stats_ref[...] = stats[None]                   # row 0 = sum, row 1 = sumsq


def _bn_act_kernel(y_ref, params_ref, o_ref):
    """Folded BN affine (scale/shift precomputed) + LeakyReLU(0.01), in place."""
    p = params_ref[...]
    scale = p[0:1, :]                              # [1, C_pad]
    shift = p[1:2, :]                              # [1, C_pad]
    z = y_ref[...] * scale + shift
    o_ref[...] = jnp.where(z >= 0, z, LEAKY_SLOPE * z)


@functools.partial(jax.jit, static_argnames=("block_m", "compute_dtype"))
def ad2_forward(x_nchw, weight, bias, gamma, beta, *, block_m=128,
                compute_dtype=jnp.float32):
    # `bias` is unused on purpose: training-mode BN subtracts the batch mean,
    # which cancels any per-channel bias added before it (exact up to fp).
    del bias

    n, c_in, h, w = x_nchw.shape
    c_out = weight.shape[0]

    patches, oh, ow = _im2col(x_nchw.astype(jnp.float32))
    m, k = patches.shape

    # Lane-dense channel dim (multiple of 128) -> unmasked stores, full MXU cols.
    c_pad = _round_up(c_out, LANE)
    # M tiling.  block_m ~512-2048 for large problems; 128 here exercises >1 tile.
    tm = max(8, min(block_m, _round_up(m, 8)))
    m_pad = _round_up(m, tm)
    num_tiles = m_pad // tm

    # compute_dtype=jnp.bfloat16 gives the v6e/v7x MXU bf16 rate (~1e-3 rel err);
    # f32 default keeps bit-accurate conv numerics for the 1e-4 check.
    patches_p = jnp.pad(patches, ((0, m_pad - m), (0, 0))).astype(compute_dtype)

    # [C_out, C_in, KH, KW] -> [C_in*KH*KW, C_pad] matching patch column order.
    w_mat = weight.astype(jnp.float32).reshape(c_out, c_in, KH * KW)
    w_mat = w_mat.transpose(1, 2, 0).reshape(k, c_out)
    w_mat = jnp.pad(w_mat, ((0, 0), (0, c_pad - c_out))).astype(compute_dtype)

    itemsize = jnp.dtype(compute_dtype).itemsize
    cost = pl.CostEstimate(
        flops=2 * m_pad * k * c_pad,
        transcendentals=0,
        bytes_accessed=(m_pad * k * itemsize + k * c_pad * itemsize
                        + m_pad * c_pad * 4 + num_tiles * 8 * c_pad * 4))

    # ---- Pass 1: conv tiles + per-tile partial BN stats -------------------
    y_full, part_stats = pl.pallas_call(
        _conv_stats_kernel,
        out_shape=(jax.ShapeDtypeStruct((m_pad, c_pad), jnp.float32),
                   jax.ShapeDtypeStruct((num_tiles, 8, c_pad), jnp.float32)),
        grid=(num_tiles,),
        in_specs=[
            pl.BlockSpec((tm, k), lambda i: (i, 0)),
            pl.BlockSpec((k, c_pad), lambda i: (0, 0)),   # resident: DMAed once
        ],
        out_specs=(
            pl.BlockSpec((tm, c_pad), lambda i: (i, 0)),
            pl.BlockSpec((1, 8, c_pad), lambda i: (i, 0, 0)),
        ),
        compiler_params=pltpu.CompilerParams(
            dimension_semantics=("parallel",),
            vmem_limit_bytes=32 * 1024 * 1024),
        cost_estimate=cost,
    )(patches_p, w_mat)

    # ---- Tiny per-channel reduction + BN folding in JAX -------------------
    tot_sum = jnp.sum(part_stats[:, 0, :], axis=0)       # [c_pad]
    tot_sumsq = jnp.sum(part_stats[:, 1, :], axis=0)     # [c_pad]
    inv_m = 1.0 / float(m)                               # true element count
    mean = tot_sum * inv_m
    var = jnp.maximum(tot_sumsq * inv_m - mean * mean, 0.0)  # biased variance
    inv_std = jax.lax.rsqrt(var + BN_EPS)
    gamma_pad = jnp.pad(gamma.astype(jnp.float32), (0, c_pad - c_out))
    beta_pad = jnp.pad(beta.astype(jnp.float32), (0, c_pad - c_out))
    scale = gamma_pad * inv_std                           # [c_pad]
    shift = beta_pad - mean * gamma_pad * inv_std         # [c_pad]
    # Pack scale/shift into one sublane-aligned param block (row0/row1).
    params = jnp.zeros((8, c_pad), jnp.float32)
    params = params.at[0].set(scale).at[1].set(shift)

    # ---- Pass 2: normalize + LeakyReLU, tiled over M, in place ------------
    out_full = pl.pallas_call(
        _bn_act_kernel,
        out_shape=jax.ShapeDtypeStruct((m_pad, c_pad), jnp.float32),
        grid=(num_tiles,),
        in_specs=[
            pl.BlockSpec((tm, c_pad), lambda i: (i, 0)),
            pl.BlockSpec((8, c_pad), lambda i: (0, 0)),
        ],
        out_specs=pl.BlockSpec((tm, c_pad), lambda i: (i, 0)),
        input_output_aliases={0: 0},     # reuse the conv buffer for the output
        compiler_params=pltpu.CompilerParams(
            dimension_semantics=("parallel",),
            vmem_limit_bytes=32 * 1024 * 1024),
    )(y_full, params)

    # [M, C_out] -> NCHW
    out = out_full[:m, :c_out].reshape(n, oh, ow, c_out).transpose(0, 3, 1, 2)
    return out


def _reference(x_nchw, weight, bias, gamma, beta):
    """Pure-JAX reference for numerical checking (matches PyTorch semantics)."""
    y = jax.lax.conv_general_dilated(
        x_nchw, weight, window_strides=(SH, SW),
        padding=((PAD, PAD), (PAD, PAD)),
        dimension_numbers=("NCHW", "OIHW", "NCHW"))
    y = y + bias[None, :, None, None]
    mean = jnp.mean(y, axis=(0, 2, 3), keepdims=True)
    var = jnp.mean((y - mean) ** 2, axis=(0, 2, 3), keepdims=True)
    y_hat = (y - mean) / jnp.sqrt(var + BN_EPS)
    z = gamma[None, :, None, None] * y_hat + beta[None, :, None, None]
    return jnp.where(z >= 0, z, LEAKY_SLOPE * z)


if __name__ == "__main__":
    key = jax.random.PRNGKey(0)
    k_x, k_w, k_b, k_g, k_be = jax.random.split(key, 5)

    N, C_IN, H, W = 2, 4, 16, 16
    C_OUT = 8

    x = jax.random.normal(k_x, (N, C_IN, H, W), dtype=jnp.float32)
    fan_in = C_IN * KH * KW
    weight = jax.random.uniform(k_w, (C_OUT, C_IN, KH, KW), jnp.float32,
                                -1.0, 1.0) / jnp.sqrt(float(fan_in))
    bias = jax.random.uniform(k_b, (C_OUT,), jnp.float32, -0.1, 0.1)
    gamma = 1.0 + 0.1 * jax.random.normal(k_g, (C_OUT,), jnp.float32)
    beta = 0.1 * jax.random.normal(k_be, (C_OUT,), jnp.float32)

    out = ad2_forward(x, weight, bias, gamma, beta)
    out = jax.block_until_ready(out)

    ref = jax.block_until_ready(_reference(x, weight, bias, gamma, beta))
    assert out.shape == (N, C_OUT, H // 2, W), out.shape
    assert jnp.allclose(out, ref, atol=1e-4, rtol=1e-4), \
        float(jnp.max(jnp.abs(out - ref)))

    print("KERNEL_OK")
</pallas_src>

<mosaic_0001>
module attributes {stable_mosaic.version = 11 : i64} {
  func.func @_bn_act_kernel(%arg0: i32, %arg1: memref<128x128xf32, #tpu.memory_space<vmem>>, %arg2: memref<8x128xf32, #tpu.memory_space<vmem>>, %arg3: memref<128x128xf32, #tpu.memory_space<vmem>>) attributes {dimension_semantics = [#tpu.dimension_semantics<parallel>], iteration_bounds = array<i64: 2>, scalar_prefetch = 0 : i64, scratch_operands = 0 : i64, tpu.core_type = #tpu.core_type<tc>, window_params = [{transform_indices = @transform_0, window_bounds = array<i64: 128, 128>}, {pipeline_mode = #tpu.pipeline_mode<synchronous>, transform_indices = @transform_1, window_bounds = array<i64: 8, 128>}, {transform_indices = @transform_2, window_bounds = array<i64: 128, 128>}]} {
    %c0 = arith.constant 0 : index
    %c0_0 = arith.constant 0 : index
    %0 = vector.load %arg2[%c0, %c0_0] : memref<8x128xf32, #tpu.memory_space<vmem>>, vector<8x128xf32>
    %1 = vector.extract_strided_slice %0 {offsets = [0, 0], sizes = [1, 128], strides = [1, 1]} : vector<8x128xf32> to vector<1x128xf32>
    %2 = vector.extract_strided_slice %0 {offsets = [1, 0], sizes = [1, 128], strides = [1, 1]} : vector<8x128xf32> to vector<1x128xf32>
    %c0_1 = arith.constant 0 : index
    %c0_2 = arith.constant 0 : index
    %3 = vector.load %arg1[%c0_1, %c0_2] : memref<128x128xf32, #tpu.memory_space<vmem>>, vector<128x128xf32>
    %4 = vector.broadcast %1 : vector<1x128xf32> to vector<128x128xf32>
    %5 = arith.mulf %3, %4 : vector<128x128xf32>
    %6 = vector.broadcast %2 : vector<1x128xf32> to vector<128x128xf32>
    %7 = arith.addf %5, %6 : vector<128x128xf32>
    %cst = arith.constant 0.000000e+00 : f32
    %8 = vector.broadcast %cst : f32 to vector<128x128xf32>
    %9 = arith.cmpf oge, %7, %8 : vector<128x128xf32>
    %cst_3 = arith.constant 0.00999999977 : f32
    %10 = vector.broadcast %cst_3 : f32 to vector<128x128xf32>
    %11 = arith.mulf %10, %7 : vector<128x128xf32>
    %12 = arith.select %9, %7, %11 : vector<128x128xi1>, vector<128x128xf32>
    %c0_4 = arith.constant 0 : index
    %c0_5 = arith.constant 0 : index
    %13 = vector.load %arg3[%c0_4, %c0_5] : memref<128x128xf32, #tpu.memory_space<vmem>>, vector<128x128xf32>
    tpu.vector_store %arg3[%c0_4, %c0_5], %12 {strides = array<i32>} : memref<128x128xf32, #tpu.memory_space<vmem>>, vector<128x128xf32>,
    return
  }
  func.func @transform_0(%arg0: i32) -> (i32, i32) {
    %c0_i32 = arith.constant 0 : i32
    %c0_i32_0 = arith.constant 0 : i32
    return %arg0, %c0_i32 : i32, i32
  }
  func.func @transform_1(%arg0: i32) -> (i32, i32) {
    %c0_i32 = arith.constant 0 : i32
    %c0_i32_0 = arith.constant 0 : i32
    %c0_i32_1 = arith.constant 0 : i32
    return %c0_i32, %c0_i32_0 : i32, i32
  }
  func.func @transform_2(%arg0: i32) -> (i32, i32) {
    %c0_i32 = arith.constant 0 : i32
    %c0_i32_0 = arith.constant 0 : i32
    return %arg0, %c0_i32 : i32, i32
  }
}

module attributes {stable_mosaic.version = 11 : i64} {
  func.func @_conv_stats_kernel(%arg0: i32, %arg1: memref<128x48xf32, #tpu.memory_space<vmem>>, %arg2: memref<48x128xf32, #tpu.memory_space<vmem>>, %arg3: memref<128x128xf32, #tpu.memory_space<vmem>>, %arg4: memref<1x8x128xf32, #tpu.memory_space<vmem>>) attributes {dimension_semantics = [#tpu.dimension_semantics<parallel>], iteration_bounds = array<i64: 2>, scalar_prefetch = 0 : i64, scratch_operands = 0 : i64, tpu.core_type = #tpu.core_type<tc>, window_params = [{transform_indices = @transform_0, window_bounds = array<i64: 128, 48>}, {pipeline_mode = #tpu.pipeline_mode<synchronous>, transform_indices = @transform_1, window_bounds = array<i64: 48, 128>}, {transform_indices = @transform_2, window_bounds = array<i64: 128, 128>}, {transform_indices = @transform_3, window_bounds = array<i64: 1, 8, 128>}]} {
    %c0 = arith.constant 0 : index
    %c0_0 = arith.constant 0 : index
    %0 = vector.load %arg1[%c0, %c0_0] : memref<128x48xf32, #tpu.memory_space<vmem>>, vector<128x48xf32>
    %c0_1 = arith.constant 0 : index
    %c0_2 = arith.constant 0 : index
    %1 = vector.load %arg2[%c0_1, %c0_2] : memref<48x128xf32, #tpu.memory_space<vmem>>, vector<48x128xf32>
    %cst = arith.constant dense<0.000000e+00> : vector<128x128xf32>
    %2 = tpu.matmul %0, %1, %cst {dimension_numbers = #tpu.dot_dimension_numbers<[1], [0], [0], [1], [0, 0, 1, 1], [], []>} : vector<128x48xf32>, vector<48x128xf32>, vector<128x128xf32> -> vector<128x128xf32>
    %c0_3 = arith.constant 0 : index
    %c0_4 = arith.constant 0 : index
    %3 = vector.load %arg3[%c0_3, %c0_4] : memref<128x128xf32, #tpu.memory_space<vmem>>, vector<128x128xf32>
    tpu.vector_store %arg3[%c0_3, %c0_4], %2 {strides = array<i32>} : memref<128x128xf32, #tpu.memory_space<vmem>>, vector<128x128xf32>,
    %cst_5 = arith.constant dense<0.000000e+00> : vector<128xf32>
    %4 = vector.multi_reduction <add>, %2, %cst_5 [0] : vector<128x128xf32> to vector<128xf32>
    %5 = vector.shape_cast %4 : vector<128xf32> to vector<1x128xf32>
    %6 = arith.mulf %2, %2 : vector<128x128xf32>
    %cst_6 = arith.constant dense<0.000000e+00> : vector<128xf32>
    %7 = vector.multi_reduction <add>, %6, %cst_6 [0] : vector<128x128xf32> to vector<128xf32>
    %8 = vector.shape_cast %7 : vector<128xf32> to vector<1x128xf32>
    %9 = tpu.iota {dimensions = array<i32: 0>} : vector<8x128xi32>
    %c0_i32 = arith.constant 0 : i32
    %10 = vector.broadcast %c0_i32 : i32 to vector<8x128xi32>
    %11 = arith.cmpi eq, %9, %10 : vector<8x128xi32>
    %c1_i32 = arith.constant 1 : i32
    %12 = vector.broadcast %c1_i32 : i32 to vector<8x128xi32>
    %13 = arith.cmpi eq, %9, %12 : vector<8x128xi32>
    %cst_7 = arith.constant 0.000000e+00 : f32
    %14 = vector.shape_cast %8 : vector<1x128xf32> to vector<1x128xf32>
    %15 = vector.broadcast %14 : vector<1x128xf32> to vector<8x128xf32>
    %16 = vector.broadcast %cst_7 : f32 to vector<8x128xf32>
    %17 = arith.select %13, %15, %16 : vector<8x128xi1>, vector<8x128xf32>
    %18 = vector.shape_cast %5 : vector<1x128xf32> to vector<1x128xf32>
    %19 = vector.broadcast %18 : vector<1x128xf32> to vector<8x128xf32>
    %20 = arith.select %11, %19, %17 : vector<8x128xi1>, vector<8x128xf32>
    %21 = vector.shape_cast %20 : vector<8x128xf32> to vector<1x8x128xf32>
    %c0_8 = arith.constant 0 : index
    %c0_9 = arith.constant 0 : index
    %c0_10 = arith.constant 0 : index
    %22 = vector.load %arg4[%c0_8, %c0_9, %c0_10] : memref<1x8x128xf32, #tpu.memory_space<vmem>>, vector<1x8x128xf32>
    tpu.vector_store %arg4[%c0_8, %c0_9, %c0_10], %21 {strides = array<i32>} : memref<1x8x128xf32, #tpu.memory_space<vmem>>, vector<1x8x128xf32>,
    return
  }
  func.func @transform_0(%arg0: i32) -> (i32, i32) {
    %c0_i32 = arith.constant 0 : i32
    %c0_i32_0 = arith.constant 0 : i32
    return %arg0, %c0_i32 : i32, i32
  }
  func.func @transform_1(%arg0: i32) -> (i32, i32) {
    %c0_i32 = arith.constant 0 : i32
    %c0_i32_0 = arith.constant 0 : i32
    %c0_i32_1 = arith.constant 0 : i32
    return %c0_i32, %c0_i32_0 : i32, i32
  }
  func.func @transform_2(%arg0: i32) -> (i32, i32) {
    %c0_i32 = arith.constant 0 : i32
    %c0_i32_0 = arith.constant 0 : i32
    return %arg0, %c0_i32 : i32, i32
  }
  func.func @transform_3(%arg0: i32) -> (i32, i32, i32) {
    %c0_i32 = arith.constant 0 : i32
    %c0_i32_0 = arith.constant 0 : i32
    %c0_i32_1 = arith.constant 0 : i32
    return %arg0, %c0_i32, %c0_i32_0 : i32, i32, i32
  }
}

</mosaic_0001>

<llo_original>
// kernel: ad2_forward.3
$region0: #{ad2_forward.3}
  #allocation0 [shape = 'u32[]', space=smem, size = 0x4, offset = 0x4, fixed_abs, tag = 'smem constant byte address 0x4 - core index']
  #allocation1 [shape = 'u32[144,128]{1,0:T(1,128)}', space=vmem, size = 0x12000, scoped, tag = 'internal scratch']
  %s0 = inlined_call_operand.vmem [shape: f32[256,128], index: 0, kind: input, shape index: {}, may-alias: {0,2}]
  %s1 = inlined_call_operand.vmem [shape: f32[8,128], index: 1, kind: input, shape index: {}]
  %s2 = inlined_call_operand.vmem [shape: f32[256,128], index: 2, kind: output, shape index: {}, may-alias: {0,2}]
  %s3 = sld [smem:[#allocation0]]
  $region41: #{ad2_forward.3} parent=0
    _
  %s5 = ssub.s32 1, %s3
  %s6 = scalar_select 0, %s5, %s3
  loop: start=0, step=1, limit=4
  $region2: #{ad2_forward.3} parent=0 // loop_pre_header
    _
  $region3: #{ad2_forward.3} parent=0 // loop_header
    %s8 = sphi 0, %s12
    %p9 = scmp.ge.s32.totalorder %s8, 4
    %s18 = sphi 0, %s20
    %s21 = sphi 0, %s18
    %s22 = sphi 0, %s21
    %s38 = sphi 0, %s22
    %s42 = sphi 0, %s42
    %s44 = sphi 0, %s42
    %s45 = sphi 0, %s44
    %s59 = sphi 0, %s45
    %s65 = sphi 0, %s67
    %s68 = sphi 0, %s65
    %s69 = sphi 0, %s68
    %s85 = sphi 0, %s69
  $region4: #{ad2_forward.3} parent=0 // loop_header_branch
    %11 = sbr.rel (%p9) target = $region8
  $region5: #{ad2_forward.3} parent=0 // loop_body
    %s13 = ssub.s32 %s8, 1
    %s14 = ssub.s32 %s8, 2
    %s15 = sadd.s32 %s8, 1
    %s16 = ssub.s32 %s8, %s15
    %p17 = scmp.eq.s32.totalorder %s16, 0
    %s19 = sadd.s32 %s18, 1
    %s20 = scalar_select %p17, %s18, %s19
    %p23 = pneg %p17
    %p24 = scmp.eq.s32.totalorder %s8, 1
    %p25 = por %p23, %p24
    %p26 = scmp.ne.s32.totalorder %s18, %s21
    %p27 = scmp.eq.s32.totalorder %s8, 0
    %p28 = por %p26, %p27
    %p29 = scmp.ne.s32.totalorder %s18, %s21
    %p30 = scmp.eq.s32.totalorder %s13, 1
    %p31 = por %p29, %p30
    %p32 = scmp.ne.s32.totalorder %s21, %s22
    %p33 = scmp.eq.s32.totalorder %s13, 0
    %p34 = por %p32, %p33
    %p35 = scmp.ne.s32.totalorder %s21, %s22
    %p36 = scmp.eq.s32.totalorder %s14, 1
    %p37 = por %p35, %p36
    %p39 = scmp.ne.s32.totalorder %s22, %s38
    %p40 = scmp.eq.s32.totalorder %s14, 0
    %p41 = por %p39, %p40
    %s43 = sadd.s32 %s42, 1
    %p46 = scmp.eq.s32.totalorder %s8, 1
    %p47 = scmp.ne.s32.totalorder %s42, %s44
    %p48 = scmp.eq.s32.totalorder %s8, 0
    %p49 = por %p47, %p48
    %p50 = scmp.ne.s32.totalorder %s42, %s44
    %p51 = scmp.eq.s32.totalorder %s13, 1
    %p52 = por %p50, %p51
    %p53 = scmp.ne.s32.totalorder %s44, %s45
    %p54 = scmp.eq.s32.totalorder %s13, 0
    %p55 = por %p53, %p54
    %p56 = scmp.ne.s32.totalorder %s44, %s45
    %p57 = scmp.eq.s32.totalorder %s14, 1
    %p58 = por %p56, %p57
    %p60 = scmp.ne.s32.totalorder %s45, %s59
    %p61 = scmp.eq.s32.totalorder %s14, 0
    %p62 = por %p60, %p61
    %s63 = ssub.s32 %s8, %s15
    %p64 = scmp.eq.s32.totalorder %s63, 0
    %s66 = sadd.s32 %s65, 1
    %s67 = scalar_select %p64, %s65, %s66
    %p70 = pneg %p64
    %p71 = scmp.eq.s32.totalorder %s8, 1
    %p72 = por %p70, %p71
    %p73 = scmp.ne.s32.totalorder %s65, %s68
    %p74 = scmp.eq.s32.totalorder %s8, 0
    %p75 = por %p73, %p74
    %p76 = scmp.ne.s32.totalorder %s65, %s68
    %p77 = scmp.eq.s32.totalorder %s13, 1
    %p78 = por %p76, %p77
    %p79 = scmp.ne.s32.totalorder %s68, %s69
    %p80 = scmp.eq.s32.totalorder %s13, 0
    %p81 = por %p79, %p80
    %p82 = scmp.ne.s32.totalorder %s68, %s69
    %p83 = scmp.eq.s32.totalorder %s14, 1
    %p84 = por %p82, %p83
    %p86 = scmp.ne.s32.totalorder %s69, %s85
    %p87 = scmp.eq.s32.totalorder %s14, 0
    %p88 = por %p86, %p87
    %p89 = scmp.le.s32.totalorder 1, %s8
    %p90 = scmp.lt.s32.totalorder %s8, 3
    %p91 = pnand %p89, %p90
    %p92 = pneg %p91
    // Predicated region
    $region9: #{ad2_forward.3} parent=5 // pred_check
      _
    $region10: #{ad2_forward.3} parent=5 // pred_check_branch
      %94 = sbr.rel (%p91) target = $region12
    $region11: #{ad2_forward.3} parent=5 // pred_region
      %s95 = ssub.s32 %s8, 1
      // Predicated region
      $region13: #{ad2_forward.3} parent=11 // pred_check
        %p96 = pneg %p55
      $region14: #{ad2_forward.3} parent=11 // pred_check_branch
        %98 = sbr.rel (%p96) target = $region16
      $region15: #{ad2_forward.3} parent=11 // pred_region
        _
      $region16: #{ad2_forward.3} parent=11 // pred_fallthru
        _
    $region12: #{ad2_forward.3} parent=5 // pred_fallthru
      _
    %p99 = scmp.lt.s32.totalorder %s8, 2
    // Predicated region
    $region17: #{ad2_forward.3} parent=5 // pred_check
      %p100 = pneg %p99
    $region18: #{ad2_forward.3} parent=5 // pred_check_branch
      %102 = sbr.rel (%p100) target = $region20
    $region19: #{ad2_forward.3} parent=5 // pred_region
      // Predicated region
      $region21: #{ad2_forward.3} parent=19 // pred_check
        %p103 = pneg %p28
      $region22: #{ad2_forward.3} parent=19 // pred_check_branch
        %105 = sbr.rel (%p103) target = $region24
      $region23: #{ad2_forward.3} parent=19 // pred_region
        %s106 = smul.u32 16, %s8
        %p107 = scmp.lt.s32.totalorder %s106, 31
        %s108 = scalar_select %p107, %s106, 31
        %s109 = smul.addr %s108, 8
        %s110 = scalar_lea.vmem %s0, %s109
        %s111 = smul.u32 16, %s8
      $region24: #{ad2_forward.3} parent=19 // pred_fallthru
        _
    $region20: #{ad2_forward.3} parent=5 // pred_fallthru
      _
    %p112 = scmp.le.s32.totalorder 1, %s8
    %p113 = scmp.lt.s32.totalorder %s8, 3
    %p114 = pnand %p112, %p113
    %p115 = pneg %p114
    // Predicated region
    $region25: #{ad2_forward.3} parent=5 // pred_check
      _
    $region26: #{ad2_forward.3} parent=5 // pred_check_branch
      %117 = sbr.rel (%p114) target = $region28
    $region27: #{ad2_forward.3} parent=5 // pred_region
      %s118 = ssub.s32 %s8, 1
      %s119 = smul.u32 16, %s13
      %p120 = scmp.lt.s32.totalorder %s119, 31
      %s121 = scalar_select %p120, %s119, 31
      %s122 = smul.addr %s121, 8
      %s123 = scalar_lea.vmem %s0, %s122
      %p124 = pneg %p34
      %p125 = pneg %p31
      %p126 = pneg %p55
      %p127 = pneg %p52
      %p128 = pneg %p81
      %p129 = pneg %p78
      %s130 = smul.u32 16, %s13
      %p131 = scmp.lt.s32.totalorder %s130, 31
      %s132 = scalar_select %p131, %s130, 31
      %s133 = smul.addr %s132, 8
      %s134 = scalar_lea.vmem %s2, %s133
      %s135 = smul.u32 16, %s13
      %p136 = scmp.lt.s32.totalorder %s135, 31
      %s137 = scalar_select %p136, %s135, 31
      %s138 = smul.addr %s137, 8
      %s139 = scalar_lea.vmem %s0, %s138
      %s140 = smul.u32 16, %s13
      %s141 = smul.u32 16, %s13
      %p142 = scmp.lt.s32.totalorder %s141, 31
      %s143 = scalar_select %p142, %s141, 31
      %s144 = smul.addr %s143, 8
      %s145 = scalar_lea.vmem %s2, %s144
      %s146 = smul.u32 16, %s13
      %v147 = vld [vmem:[%s1] sm:$0xff]
      %v148 = vld [vmem:[%s139] sm:$0xff]
      %v149 = vld [vmem:[%s139 + $0x8] sm:$0xff]
      %v150 = vld [vmem:[%s139 + $0x10] sm:$0xff]
      %v151 = vld [vmem:[%s139 + $0x18] sm:$0xff]
      %v152 = vld [vmem:[%s139 + $0x20] sm:$0xff]
      %v153 = vld [vmem:[%s139 + $0x28] sm:$0xff]
      %v154 = vld [vmem:[%s139 + $0x30] sm:$0xff]
      %v155 = vld [vmem:[%s139 + $0x38] sm:$0xff]
      %v156 = vld [vmem:[%s139 + $0x40] sm:$0xff]
      %v157 = vld [vmem:[%s139 + $0x48] sm:$0xff]
      %v158 = vld [vmem:[%s139 + $0x50] sm:$0xff]
      %v159 = vld [vmem:[%s139 + $0x58] sm:$0xff]
      %v160 = vld [vmem:[%s139 + $0x60] sm:$0xff]
      %v161 = vld [vmem:[%s139 + $0x68] sm:$0xff]
      %v162 = vld [vmem:[%s139 + $0x70] sm:$0xff]
      %v163 = vld [vmem:[%s139 + $0x78] sm:$0xff]
      %v164 = vlaneseq
      %v165 = vshrl.u32 %v164, 7
      %v166 = vsub.s32 0, %v165
      %v167 = vrot.slane %v147, %v166
      %v168 = vmul.f32 %v148, %v167
      %v169 = vmul.f32 %v149, %v167
      %v170 = vmul.f32 %v150, %v167
      %v171 = vmul.f32 %v151, %v167
      %v172 = vmul.f32 %v152, %v167
      %v173 = vmul.f32 %v153, %v167
      %v174 = vmul.f32 %v154, %v167
      %v175 = vmul.f32 %v155, %v167
      %v176 = vmul.f32 %v156, %v167
      %v177 = vmul.f32 %v157, %v167
      %v178 = vmul.f32 %v158, %v167
      %v179 = vmul.f32 %v159, %v167
      %v180 = vmul.f32 %v160, %v167
      %v181 = vmul.f32 %v161, %v167
      %v182 = vmul.f32 %v162, %v167
      %v183 = vmul.f32 %v163, %v167
      %v184 = vlaneseq
      %v185 = vshrl.u32 %v184, 7
      %v186 = vsub.s32 1, %v185
      %v187 = vrot.slane %v147, %v186
      %v188 = vadd.f32 %v168, %v187
      %v189 = vadd.f32 %v169, %v187
      %v190 = vadd.f32 %v170, %v187
      %v191 = vadd.f32 %v171, %v187
      %v192 = vadd.f32 %v172, %v187
      %v193 = vadd.f32 %v173, %v187
      %v194 = vadd.f32 %v174, %v187
      %v195 = vadd.f32 %v175, %v187
      %v196 = vadd.f32 %v176, %v187
      %v197 = vadd.f32 %v177, %v187
      %v198 = vadd.f32 %v178, %v187
      %v199 = vadd.f32 %v179, %v187
      %v200 = vadd.f32 %v180, %v187
      %v201 = vadd.f32 %v181, %v187
      %v202 = vadd.f32 %v182, %v187
      %v203 = vadd.f32 %v183, %v187
      %vm204 = vcmp.ge.f32.partialorder %v188, 0.0
      %vm205 = vcmp.ge.f32.partialorder %v189, 0.0
      %vm206 = vcmp.ge.f32.partialorder %v190, 0.0
      %vm207 = vcmp.ge.f32.partialorder %v191, 0.0
      %vm208 = vcmp.ge.f32.partialorder %v192, 0.0
      %vm209 = vcmp.ge.f32.partialorder %v193, 0.0
      %vm210 = vcmp.ge.f32.partialorder %v194, 0.0
      %vm211 = vcmp.ge.f32.partialorder %v195, 0.0
      %vm212 = vcmp.ge.f32.partialorder %v196, 0.0
      %vm213 = vcmp.ge.f32.partialorder %v197, 0.0
      %vm214 = vcmp.ge.f32.partialorder %v198, 0.0
      %vm215 = vcmp.ge.f32.partialorder %v199, 0.0
      %vm216 = vcmp.ge.f32.partialorder %v200, 0.0
      %vm217 = vcmp.ge.f32.partialorder %v201, 0.0
      %vm218 = vcmp.ge.f32.partialorder %v202, 0.0
      %vm219 = vcmp.ge.f32.partialorder %v203, 0.0
      %v220 = vmul.f32 %v188, 0.01
      %v221 = vmul.f32 %v189, 0.01
      %v222 = vmul.f32 %v190, 0.01
      %v223 = vmul.f32 %v191, 0.01
      %v224 = vmul.f32 %v192, 0.01
      %v225 = vmul.f32 %v193, 0.01
      %v226 = vmul.f32 %v194, 0.01
      %v227 = vmul.f32 %v195, 0.01
      %v228 = vmul.f32 %v196, 0.01
      %v229 = vmul.f32 %v197, 0.01
      %v230 = vmul.f32 %v198, 0.01
      %v231 = vmul.f32 %v199, 0.01
      %v232 = vmul.f32 %v200, 0.01
      %v233 = vmul.f32 %v201, 0.01
      %v234 = vmul.f32 %v202, 0.01
      %v235 = vmul.f32 %v203, 0.01
      %v236 = vsel %vm204, %v188, %v220
      %v237 = vsel %vm205, %v189, %v221
      %v238 = vsel %vm206, %v190, %v222
      %v239 = vsel %vm207, %v191, %v223
      %v240 = vsel %vm208, %v192, %v224
      %v241 = vsel %vm209, %v193, %v225
      %v242 = vsel %vm210, %v194, %v226
      %v243 = vsel %vm211, %v195, %v227
      %v244 = vsel %vm212, %v196, %v228
      %v245 = vsel %vm213, %v197, %v229
      %v246 = vsel %vm214, %v198, %v230
      %v247 = vsel %vm215, %v199, %v231
      %v248 = vsel %vm216, %v200, %v232
      %v249 = vsel %vm217, %v201, %v233
      %v250 = vsel %vm218, %v202, %v234
      %v251 = vsel %vm219, %v203, %v235
      %252 = vst [vmem:[%s145] sm:$0xff] %v236
      %253 = vst [vmem:[%s145 + $0x8] sm:$0xff] %v237
      %254 = vst [vmem:[%s145 + $0x10] sm:$0xff] %v238
      %255 = vst [vmem:[%s145 + $0x18] sm:$0xff] %v239
      %256 = vst [vmem:[%s145 + $0x20] sm:$0xff] %v240
      %257 = vst [vmem:[%s145 + $0x28] sm:$0xff] %v241
      %258 = vst [vmem:[%s145 + $0x30] sm:$0xff] %v242
      %259 = vst [vmem:[%s145 + $0x38] sm:$0xff] %v243
      %260 = vst [vmem:[%s145 + $0x40] sm:$0xff] %v244
      %261 = vst [vmem:[%s145 + $0x48] sm:$0xff] %v245
      %262 = vst [vmem:[%s145 + $0x50] sm:$0xff] %v246
      %263 = vst [vmem:[%s145 + $0x58] sm:$0xff] %v247
      %264 = vst [vmem:[%s145 + $0x60] sm:$0xff] %v248
      %265 = vst [vmem:[%s145 + $0x68] sm:$0xff] %v249
      %266 = vst [vmem:[%s145 + $0x70] sm:$0xff] %v250
      %267 = vst [vmem:[%s145 + $0x78] sm:$0xff] %v251
      %s268 = smul.u32 16, %s13
      %p269 = scmp.lt.s32.totalorder %s268, 31
      %s270 = scalar_select %p269, %s268, 31
      %s271 = smul.addr %s270, 8
      %s272 = scalar_lea.vmem %s2, %s271
      // Predicated region
      $region29: #{ad2_forward.3} parent=27 // pred_check
        %p273 = pneg %p78
      $region30: #{ad2_forward.3} parent=27 // pred_check_branch
        %275 = sbr.rel (%p273) target = $region32
      $region31: #{ad2_forward.3} parent=27 // pred_region
        %s276 = smul.u32 16, %s13
      $region32: #{ad2_forward.3} parent=27 // pred_fallthru
        _
    $region28: #{ad2_forward.3} parent=5 // pred_fallthru
      _
    %p277 = scmp.le.s32.totalorder 2, %s8
    // Predicated region
    $region33: #{ad2_forward.3} parent=5 // pred_check
      %p278 = pneg %p277
    $region34: #{ad2_forward.3} parent=5 // pred_check_branch
      %280 = sbr.rel (%p278) target = $region36
    $region35: #{ad2_forward.3} parent=5 // pred_region
      %s281 = ssub.s32 %s8, 2
      // Predicated region
      $region37: #{ad2_forward.3} parent=35 // pred_check
        %p282 = pneg %p84
      $region38: #{ad2_forward.3} parent=35 // pred_check_branch
        %284 = sbr.rel (%p282) target = $region40
      $region39: #{ad2_forward.3} parent=35 // pred_region
        %s285 = smul.u32 16, %s14
        %p286 = scmp.lt.s32.totalorder %s285, 31
        %s287 = scalar_select %p286, %s285, 31
        %s288 = smul.addr %s287, 8
        %s289 = scalar_lea.vmem %s2, %s288
      $region40: #{ad2_forward.3} parent=35 // pred_fallthru
        _
    $region36: #{ad2_forward.3} parent=5 // pred_fallthru
      _
  $region6: #{ad2_forward.3} parent=0 // loop_footer
    %s12 = sadd.s32 1, %s8
  $region7: #{ad2_forward.3} parent=0 // loop_footer_branch
    %7 = sbr.rel target = $region3
  $region8: #{ad2_forward.3} parent=0 // loop_exit
    _

// kernel: ad2_forward.2
$region0: #{ad2_forward.2}
  #allocation0 [shape = 'u32[]', space=smem, size = 0x4, offset = 0x4, fixed_abs, tag = 'smem constant byte address 0x4 - core index']
  #allocation1 [shape = 'u32[144,128]{1,0:T(1,128)}', space=vmem, size = 0x12000, scoped, tag = 'internal scratch']
  %s0 = inlined_call_operand.vmem [shape: f32[256,48], index: 0, kind: input, shape index: {}]
  %s1 = inlined_call_operand.vmem [shape: f32[48,128], index: 1, kind: input, shape index: {}]
  %s2 = inlined_call_operand.vmem [shape: f32[256,128], index: 2, kind: output, shape index: {0}]
  %s3 = inlined_call_operand.vmem [shape: f32[2,8,128], index: 3, kind: output, shape index: {1}]
  %4 = xla_tuple %s2, %s3
  %s5 = sld [smem:[#allocation0]]
  $region49: #{ad2_forward.2} parent=0
    _
  %s7 = ssub.s32 1, %s5
  %s8 = scalar_select 0, %s7, %s5
  loop: start=0, step=1, limit=4
  $region2: #{ad2_forward.2} parent=0 // loop_pre_header
    _
  $region3: #{ad2_forward.2} parent=0 // loop_header
    %s10 = sphi 0, %s14
    %p11 = scmp.ge.s32.totalorder %s10, 4
    %s20 = sphi 0, %s22
    %s23 = sphi 0, %s20
    %s24 = sphi 0, %s23
    %s40 = sphi 0, %s24
    %s44 = sphi 0, %s44
    %s46 = sphi 0, %s44
    %s47 = sphi 0, %s46
    %s61 = sphi 0, %s47
    %s67 = sphi 0, %s69
    %s70 = sphi 0, %s67
    %s71 = sphi 0, %s70
    %s87 = sphi 0, %s71
    %s93 = sphi 0, %s95
    %s96 = sphi 0, %s93
    %s97 = sphi 0, %s96
    %s113 = sphi 0, %s97
  $region4: #{ad2_forward.2} parent=0 // loop_header_branch
    %13 = sbr.rel (%p11) target = $region8
  $region5: #{ad2_forward.2} parent=0 // loop_body
    %s15 = ssub.s32 %s10, 1
    %s16 = ssub.s32 %s10, 2
    %s17 = sadd.s32 %s10, 1
    %s18 = ssub.s32 %s10, %s17
    %p19 = scmp.eq.s32.totalorder %s18, 0
    %s21 = sadd.s32 %s20, 1
    %s22 = scalar_select %p19, %s20, %s21
    %p25 = pneg %p19
    %p26 = scmp.eq.s32.totalorder %s10, 1
    %p27 = por %p25, %p26
    %p28 = scmp.ne.s32.totalorder %s20, %s23
    %p29 = scmp.eq.s32.totalorder %s10, 0
    %p30 = por %p28, %p29
    %p31 = scmp.ne.s32.totalorder %s20, %s23
    %p32 = scmp.eq.s32.totalorder %s15, 1
    %p33 = por %p31, %p32
    %p34 = scmp.ne.s32.totalorder %s23, %s24
    %p35 = scmp.eq.s32.totalorder %s15, 0
    %p36 = por %p34, %p35
    %p37 = scmp.ne.s32.totalorder %s23, %s24
    %p38 = scmp.eq.s32.totalorder %s16, 1
    %p39 = por %p37, %p38
    %p41 = scmp.ne.s32.totalorder %s24, %s40
    %p42 = scmp.eq.s32.totalorder %s16, 0
    %p43 = por %p41, %p42
    %s45 = sadd.s32 %s44, 1
    %p48 = scmp.eq.s32.totalorder %s10, 1
    %p49 = scmp.ne.s32.totalorder %s44, %s46
    %p50 = scmp.eq.s32.totalorder %s10, 0
    %p51 = por %p49, %p50
    %p52 = scmp.ne.s32.totalorder %s44, %s46
    %p53 = scmp.eq.s32.totalorder %s15, 1
    %p54 = por %p52, %p53
    %p55 = scmp.ne.s32.totalorder %s46, %s47
    %p56 = scmp.eq.s32.totalorder %s15, 0
    %p57 = por %p55, %p56
    %p58 = scmp.ne.s32.totalorder %s46, %s47
    %p59 = scmp.eq.s32.totalorder %s16, 1
    %p60 = por %p58, %p59
    %p62 = scmp.ne.s32.totalorder %s47, %s61
    %p63 = scmp.eq.s32.totalorder %s16, 0
    %p64 = por %p62, %p63
    %s65 = ssub.s32 %s10, %s17
    %p66 = scmp.eq.s32.totalorder %s65, 0
    %s68 = sadd.s32 %s67, 1
    %s69 = scalar_select %p66, %s67, %s68
    %p72 = pneg %p66
    %p73 = scmp.eq.s32.totalorder %s10, 1
    %p74 = por %p72, %p73
    %p75 = scmp.ne.s32.totalorder %s67, %s70
    %p76 = scmp.eq.s32.totalorder %s10, 0
    %p77 = por %p75, %p76
    %p78 = scmp.ne.s32.totalorder %s67, %s70
    %p79 = scmp.eq.s32.totalorder %s15, 1
    %p80 = por %p78, %p79
    %p81 = scmp.ne.s32.totalorder %s70, %s71
    %p82 = scmp.eq.s32.totalorder %s15, 0
    %p83 = por %p81, %p82
    %p84 = scmp.ne.s32.totalorder %s70, %s71
    %p85 = scmp.eq.s32.totalorder %s16, 1
    %p86 = por %p84, %p85
    %p88 = scmp.ne.s32.totalorder %s71, %s87
    %p89 = scmp.eq.s32.totalorder %s16, 0
    %p90 = por %p88, %p89
    %s91 = ssub.s32 %s10, %s17
    %p92 = scmp.eq.s32.totalorder %s91, 0
    %s94 = sadd.s32 %s93, 1
    %s95 = scalar_select %p92, %s93, %s94
    %p98 = pneg %p92
    %p99 = scmp.eq.s32.totalorder %s10, 1
    %p100 = por %p98, %p99
    %p101 = scmp.ne.s32.totalorder %s93, %s96
    %p102 = scmp.eq.s32.totalorder %s10, 0
    %p103 = por %p101, %p102
    %p104 = scmp.ne.s32.totalorder %s93, %s96
    %p105 = scmp.eq.s32.totalorder %s15, 1
    %p106 = por %p104, %p105
    %p107 = scmp.ne.s32.totalorder %s96, %s97
    %p108 = scmp.eq.s32.totalorder %s15, 0
    %p109 = por %p107, %p108
    %p110 = scmp.ne.s32.totalorder %s96, %s97
    %p111 = scmp.eq.s32.totalorder %s16, 1
    %p112 = por %p110, %p111
    %p114 = scmp.ne.s32.totalorder %s97, %s113
    %p115 = scmp.eq.s32.totalorder %s16, 0
    %p116 = por %p114, %p115
    %p117 = scmp.le.s32.totalorder 1, %s10
    %p118 = scmp.lt.s32.totalorder %s10, 3
    %p119 = pnand %p117, %p118
    %p120 = pneg %p119
    // Predicated region
    $region9: #{ad2_forward.2} parent=5 // pred_check
      _
    $region10: #{ad2_forward.2} parent=5 // pred_check_branch
      %122 = sbr.rel (%p119) target = $region12
    $region11: #{ad2_forward.2} parent=5 // pred_region
      %s123 = ssub.s32 %s10, 1
      // Predicated region
      $region13: #{ad2_forward.2} parent=11 // pred_check
        %p124 = pneg %p57
      $region14: #{ad2_forward.2} parent=11 // pred_check_branch
        %126 = sbr.rel (%p124) target = $region16
      $region15: #{ad2_forward.2} parent=11 // pred_region
        _
      $region16: #{ad2_forward.2} parent=11 // pred_fallthru
        _
    $region12: #{ad2_forward.2} parent=5 // pred_fallthru
      _
    %p127 = scmp.lt.s32.totalorder %s10, 2
    // Predicated region
    $region17: #{ad2_forward.2} parent=5 // pred_check
      %p128 = pneg %p127
    $region18: #{ad2_forward.2} parent=5 // pred_check_branch
      %130 = sbr.rel (%p128) target = $region20
    $region19: #{ad2_forward.2} parent=5 // pred_region
      // Predicated region
      $region21: #{ad2_forward.2} parent=19 // pred_check
        %p131 = pneg %p30
      $region22: #{ad2_forward.2} parent=19 // pred_check_branch
        %133 = sbr.rel (%p131) target = $region24
      $region23: #{ad2_forward.2} parent=19 // pred_region
        %s134 = smul.u32 16, %s10
        %p135 = scmp.lt.s32.totalorder %s134, 31
        %s136 = scalar_select %p135, %s134, 31
        %s137 = smul.addr %s136, 8
        %s138 = scalar_lea.vmem %s0, %s137
        %s139 = smul.u32 16, %s10
      $region24: #{ad2_forward.2} parent=19 // pred_fallthru
        _
    $region20: #{ad2_forward.2} parent=5 // pred_fallthru
      _
    %p140 = scmp.le.s32.totalorder 1, %s10
    %p141 = scmp.lt.s32.totalorder %s10, 3
    %p142 = pnand %p140, %p141
    %p143 = pneg %p142
    // Predicated region
    $region25: #{ad2_forward.2} parent=5 // pred_check
      _
    $region26: #{ad2_forward.2} parent=5 // pred_check_branch
      %145 = sbr.rel (%p142) target = $region28
    $region27: #{ad2_forward.2} parent=5 // pred_region
      %s146 = ssub.s32 %s10, 1
      %s147 = smul.u32 16, %s15
      %p148 = scmp.lt.s32.totalorder %s147, 31
      %s149 = scalar_select %p148, %s147, 31
      %s150 = smul.addr %s149, 8
      %s151 = scalar_lea.vmem %s0, %s150
      %p152 = pneg %p36
      %p153 = pneg %p33
      %p154 = pneg %p57
      %p155 = pneg %p54
      %p156 = pneg %p83
      %p157 = pneg %p80
      %s158 = smul.u32 16, %s15
      %p159 = scmp.lt.s32.totalorder %s158, 31
      %s160 = scalar_select %p159, %s158, 31
      %s161 = smul.addr %s160, 8
      %s162 = scalar_lea.vmem %s2, %s161
      %p163 = pneg %p109
      %p164 = pneg %p106
      %p165 = scmp.lt.s32.totalorder %s15, 1
      %s166 = scalar_select %p165, %s15, 1
      %s167 = smul.addr %s166, 8
      %s168 = scalar_lea.vmem %s3, %s167
      %s169 = smul.u32 16, %s15
      %p170 = scmp.lt.s32.totalorder %s169, 31
      %s171 = scalar_select %p170, %s169, 31
      %s172 = smul.addr %s171, 8
      %s173 = scalar_lea.vmem %s0, %s172
      %s174 = smul.u32 16, %s15
      %s175 = smul.u32 16, %s15
      %p176 = scmp.lt.s32.totalorder %s175, 31
      %s177 = scalar_select %p176, %s175, 31
      %s178 = smul.addr %s177, 8
      %s179 = scalar_lea.vmem %s2, %s178
      %s180 = smul.u32 16, %s15
      %p181 = scmp.lt.s32.totalorder %s15, 1
      %s182 = scalar_select %p181, %s15, 1
      %s183 = smul.addr %s182, 8
      %s184 = scalar_lea.vmem %s3, %s183
      %v185 = vld [vmem:[%s173] sm:$0xff]
      %v186 = vld [vmem:[%s173 + $0x8] sm:$0xff]
      %v187 = vld [vmem:[%s173 + $0x10] sm:$0xff]
      %v188 = vld [vmem:[%s173 + $0x18] sm:$0xff]
      %v189 = vld [vmem:[%s173 + $0x20] sm:$0xff]
      %v190 = vld [vmem:[%s173 + $0x28] sm:$0xff]
      %v191 = vld [vmem:[%s173 + $0x30] sm:$0xff]
      %v192 = vld [vmem:[%s173 + $0x38] sm:$0xff]
      %v193 = vld [vmem:[%s173 + $0x40] sm:$0xff]
      %v194 = vld [vmem:[%s173 + $0x48] sm:$0xff]
      %v195 = vld [vmem:[%s173 + $0x50] sm:$0xff]
      %v196 = vld [vmem:[%s173 + $0x58] sm:$0xff]
      %v197 = vld [vmem:[%s173 + $0x60] sm:$0xff]
      %v198 = vld [vmem:[%s173 + $0x68] sm:$0xff]
      %v199 = vld [vmem:[%s173 + $0x70] sm:$0xff]
      %v200 = vld [vmem:[%s173 + $0x78] sm:$0xff]
      %v201 = vld [vmem:[%s1] sm:$0xff]
      %v202 = vld [vmem:[%s1 + $0x8] sm:$0xff]
      %v203 = vld [vmem:[%s1 + $0x10] sm:$0xff]
      %v204 = vld [vmem:[%s1 + $0x18] sm:$0xff]
      %v205 = vld [vmem:[%s1 + $0x20] sm:$0xff]
      %v206 = vld [vmem:[%s1 + $0x28] sm:$0xff]
      %vm207 = vcmask 392192
      %v209 = vsel %vm207, %v185, 0
      %v212 = vsel %vm207, %v186, 0
      %v215 = vsel %vm207, %v187, 0
      %v218 = vsel %vm207, %v188, 0
      %v221 = vsel %vm207, %v189, 0
      %v224 = vsel %vm207, %v190, 0
      %v227 = vsel %vm207, %v191, 0
      %v230 = vsel %vm207, %v192, 0
      %v233 = vsel %vm207, %v193, 0
      %v236 = vsel %vm207, %v194, 0
      %v239 = vsel %vm207, %v195, 0
      %v242 = vsel %vm207, %v196, 0
      %v245 = vsel %vm207, %v197, 0
      %v248 = vsel %vm207, %v198, 0
      %v251 = vsel %vm207, %v199, 0
      %v254 = vsel %vm207, %v200, 0
      %256 = vmatprep.subr.mxu0 0.0
      %257 = vmatpush1.msra.mxu0 0.0
      %258 = vmatprep.subr.mxu0 0.0
      %259 = vmatpush1.msra.mxu0 0.0
      %260 = vmatprep.subr.mxu0 0.0
      %261 = vmatpush1.msra.mxu0 0.0
      %262 = vmatprep.subr.mxu0 0.0
      %263 = vmatpush1.msra.mxu0 0.0
      %264 = vmatprep.subr.mxu0 0.0
      %265 = vmatpush1.msra.mxu0 0.0
      %266 = vmatprep.subr.mxu0 0.0
      %267 = vmatpush1.msra.mxu0 0.0
      %268 = vmatprep.subr.mxu0 0.0
      %269 = vmatpush1.msra.mxu0 0.0
      %270 = vmatprep.subr.mxu0 0.0
      %271 = vmatpush1.msra.mxu0 0.0
      %272 = vmatprep.subr.mxu0 0.0
      %273 = vmatpush1.msra.mxu0 0.0
      %274 = vmatprep.subr.mxu0 0.0
      %275 = vmatpush1.msra.mxu0 0.0
      %276 = vmatprep.subr.mxu0 0.0
      %277 = vmatpush1.msra.mxu0 %v206
      %278 = vmatprep.subr.mxu0 0.0
      %279 = vmatpush1.msra.mxu0 %v205
      %280 = vmatprep.subr.mxu0 0.0
      %281 = vmatpush1.msra.mxu0 %v204
      %282 = vmatprep.subr.mxu0 0.0
      %283 = vmatpush1.msra.mxu0 %v203
      %284 = vmatprep.subr.mxu0 0.0
      %285 = vmatpush1.msra.mxu0 %v202
      %286 = vmatprep.subr.mxu0 0.0
      %287 = vmatpush1.msra.mxu0 %v201
      %288 = vmatprep.subr.mxu0 0.0
      %289 = vmatpush2.msra.mxu0 0.0
      %290 = vmatprep.subr.mxu0 0.0
      %291 = vmatpush2.msra.mxu0 0.0
      %292 = vmatprep.subr.mxu0 0.0
      %293 = vmatpush2.msra.mxu0 0.0
      %294 = vmatprep.subr.mxu0 0.0
      %295 = vmatpush2.msra.mxu0 0.0
      %296 = vmatprep.subr.mxu0 0.0
      %297 = vmatpush2.msra.mxu0 0.0
      %298 = vmatprep.subr.mxu0 0.0
      %299 = vmatpush2.msra.mxu0 0.0
      %300 = vmatprep.subr.mxu0 0.0
      %301 = vmatpush2.msra.mxu0 0.0
      %302 = vmatprep.subr.mxu0 0.0
      %303 = vmatpush2.msra.mxu0 0.0
      %304 = vmatprep.subr.mxu0 0.0
      %305 = vmatpush2.msra.mxu0 0.0
      %306 = vmatprep.subr.mxu0 0.0
      %307 = vmatpush2.msra.mxu0 0.0
      %308 = vmatprep.subr.mxu0 0.0
      %309 = vmatpush2.msra.mxu0 0.0
      %310 = vmatprep.subr.mxu0 0.0
      %311 = vmatpush2.msra.mxu0 0.0
      %312 = vmatprep.subr.mxu0 0.0
      %313 = vmatpush2.msra.mxu0 0.0
      %314 = vmatprep.subr.mxu0 0.0
      %315 = vmatpush2.msra.mxu0 0.0
      %316 = vmatprep.subr.mxu0 0.0
      %317 = vmatpush2.msra.mxu0 0.0
      %318 = vmatprep.subr.mxu0 0.0
      %319 = vmatpush2.msra.mxu0 0.0
      %320 = vmatprep.mubr.f32.mxu0 0.0
      %321 = vmatmul.mubr.f32.gmra.mxu0 %v209
      %v322 = vpop.f32.mrf.mxu0
      %v323 = vadd.f32 0.0, %v322
      %v324 = vpop.f32.mrf.mxu0
      %325 = vmatprep.mubr.f32.mxu0 0.0
      %326 = vmatmul.mubr.f32.gmra.mxu0 %v212
      %v327 = vpop.f32.mrf.mxu0
      %v328 = vadd.f32 0.0, %v327
      %v329 = vpop.f32.mrf.mxu0
      %330 = vmatprep.mubr.f32.mxu0 0.0
      %331 = vmatmul.mubr.f32.gmra.mxu0 %v215
      %v332 = vpop.f32.mrf.mxu0
      %v333 = vadd.f32 0.0, %v332
      %v334 = vpop.f32.mrf.mxu0
      %335 = vmatprep.mubr.f32.mxu0 0.0
      %336 = vmatmul.mubr.f32.gmra.mxu0 %v218
      %v337 = vpop.f32.mrf.mxu0
      %v338 = vadd.f32 0.0, %v337
      %v339 = vpop.f32.mrf.mxu0
      %340 = vmatprep.mubr.f32.mxu0 0.0
      %341 = vmatmul.mubr.f32.gmra.mxu0 %v221
      %v342 = vpop.f32.mrf.mxu0
      %v343 = vadd.f32 0.0, %v342
      %v344 = vpop.f32.mrf.mxu0
      %345 = vmatprep.mubr.f32.mxu0 0.0
      %346 = vmatmul.mubr.f32.gmra.mxu0 %v224
      %v347 = vpop.f32.mrf.mxu0
      %v348 = vadd.f32 0.0, %v347
      %v349 = vpop.f32.mrf.mxu0
      %350 = vmatprep.mubr.f32.mxu0 0.0
      %351 = vmatmul.mubr.f32.gmra.mxu0 %v227
      %v352 = vpop.f32.mrf.mxu0
      %v353 = vadd.f32 0.0, %v352
      %v354 = vpop.f32.mrf.mxu0
      %355 = vmatprep.mubr.f32.mxu0 0.0
      %356 = vmatmul.mubr.f32.gmra.mxu0 %v230
      %v357 = vpop.f32.mrf.mxu0
      %v358 = vadd.f32 0.0, %v357
      %v359 = vpop.f32.mrf.mxu0
      %360 = vmatprep.mubr.f32.mxu0 0.0
      %361 = vmatmul.mubr.f32.gmra.mxu0 %v233
      %v362 = vpop.f32.mrf.mxu0
      %v363 = vadd.f32 0.0, %v362
      %v364 = vpop.f32.mrf.mxu0
      %365 = vmatprep.mubr.f32.mxu0 0.0
      %366 = vmatmul.mubr.f32.gmra.mxu0 %v236
      %v367 = vpop.f32.mrf.mxu0
      %v368 = vadd.f32 0.0, %v367
      %v369 = vpop.f32.mrf.mxu0
      %370 = vmatprep.mubr.f32.mxu0 0.0
      %371 = vmatmul.mubr.f32.gmra.mxu0 %v239
      %v372 = vpop.f32.mrf.mxu0
      %v373 = vadd.f32 0.0, %v372
      %v374 = vpop.f32.mrf.mxu0
      %375 = vmatprep.mubr.f32.mxu0 0.0
      %376 = vmatmul.mubr.f32.gmra.mxu0 %v242
      %v377 = vpop.f32.mrf.mxu0
      %v378 = vadd.f32 0.0, %v377
      %v379 = vpop.f32.mrf.mxu0
      %380 = vmatprep.mubr.f32.mxu0 0.0
      %381 = vmatmul.mubr.f32.gmra.mxu0 %v245
      %v382 = vpop.f32.mrf.mxu0
      %v383 = vadd.f32 0.0, %v382
      %v384 = vpop.f32.mrf.mxu0
      %385 = vmatprep.mubr.f32.mxu0 0.0
      %386 = vmatmul.mubr.f32.gmra.mxu0 %v248
      %v387 = vpop.f32.mrf.mxu0
      %v388 = vadd.f32 0.0, %v387
      %v389 = vpop.f32.mrf.mxu0
      %390 = vmatprep.mubr.f32.mxu0 0.0
      %391 = vmatmul.mubr.f32.gmra.mxu0 %v251
      %v392 = vpop.f32.mrf.mxu0
      %v393 = vadd.f32 0.0, %v392
      %v394 = vpop.f32.mrf.mxu0
      %395 = vmatprep.mubr.f32.mxu0 0.0
      %396 = vmatmul.mubr.f32.gmra.mxu0 %v254
      %v397 = vpop.f32.mrf.mxu0
      %v398 = vadd.f32 0.0, %v397
      %v399 = vpop.f32.mrf.mxu0
      %400 = vdwg.mxu0
      %401 = vst [vmem:[%s179] sm:$0xff] %v323
      %402 = vst [vmem:[%s179 + $0x8] sm:$0xff] %v328
      %403 = vst [vmem:[%s179 + $0x10] sm:$0xff] %v333
      %404 = vst [vmem:[%s179 + $0x18] sm:$0xff] %v338
      %405 = vst [vmem:[%s179 + $0x20] sm:$0xff] %v343
      %406 = vst [vmem:[%s179 + $0x28] sm:$0xff] %v348
      %407 = vst [vmem:[%s179 + $0x30] sm:$0xff] %v353
      %408 = vst [vmem:[%s179 + $0x38] sm:$0xff] %v358
      %409 = vst [vmem:[%s179 + $0x40] sm:$0xff] %v363
      %410 = vst [vmem:[%s179 + $0x48] sm:$0xff] %v368
      %411 = vst [vmem:[%s179 + $0x50] sm:$0xff] %v373
      %412 = vst [vmem:[%s179 + $0x58] sm:$0xff] %v378
      %413 = vst [vmem:[%s179 + $0x60] sm:$0xff] %v383
      %414 = vst [vmem:[%s179 + $0x68] sm:$0xff] %v388
      %415 = vst [vmem:[%s179 + $0x70] sm:$0xff] %v393
      %416 = vst [vmem:[%s179 + $0x78] sm:$0xff] %v398
      %v417 = vadd.f32 %v323, %v328
      %v418 = vadd.f32 %v417, %v333
      %v419 = vadd.f32 %v418, %v338
      %v420 = vadd.f32 %v419, %v343
      %v421 = vadd.f32 %v420, %v348
      %v422 = vadd.f32 %v421, %v353
      %v423 = vadd.f32 %v422, %v358
      %v424 = vadd.f32 %v423, %v363
      %v425 = vadd.f32 %v424, %v368
      %v426 = vadd.f32 %v425, %v373
      %v427 = vadd.f32 %v426, %v378
      %v428 = vadd.f32 %v427, %v383
      %v429 = vadd.f32 %v428, %v388
      %v430 = vadd.f32 %v429, %v393
      %v431 = vadd.f32 %v430, %v398
      %v432 = vrot.slane %v431, 4
      %v433 = vadd.f32 %v431, %v432
      %v434 = vrot.slane %v433, 2
      %v435 = vadd.f32 %v433, %v434
      %v436 = vrot.slane %v435, 1
      %v437 = vadd.f32 %v435, %v436
      %v438 = vmul.f32 %v323, %v323
      %v439 = vmul.f32 %v328, %v328
      %v440 = vmul.f32 %v333, %v333
      %v441 = vmul.f32 %v338, %v338
      %v442 = vmul.f32 %v343, %v343
      %v443 = vmul.f32 %v348, %v348
      %v444 = vmul.f32 %v353, %v353
      %v445 = vmul.f32 %v358, %v358
      %v446 = vmul.f32 %v363, %v363
      %v447 = vmul.f32 %v368, %v368
      %v448 = vmul.f32 %v373, %v373
      %v449 = vmul.f32 %v378, %v378
      %v450 = vmul.f32 %v383, %v383
      %v451 = vmul.f32 %v388, %v388
      %v452 = vmul.f32 %v393, %v393
      %v453 = vmul.f32 %v398, %v398
      %v454 = vadd.f32 %v438, %v439
      %v455 = vadd.f32 %v454, %v440
      %v456 = vadd.f32 %v455, %v441
      %v457 = vadd.f32 %v456, %v442
      %v458 = vadd.f32 %v457, %v443
      %v459 = vadd.f32 %v458, %v444
      %v460 = vadd.f32 %v459, %v445
      %v461 = vadd.f32 %v460, %v446
      %v462 = vadd.f32 %v461, %v447
      %v463 = vadd.f32 %v462, %v448
      %v464 = vadd.f32 %v463, %v449
      %v465 = vadd.f32 %v464, %v450
      %v466 = vadd.f32 %v465, %v451
      %v467 = vadd.f32 %v466, %v452
      %v468 = vadd.f32 %v467, %v453
      %v469 = vrot.slane %v468, 4
      %v470 = vadd.f32 %v468, %v469
      %v471 = vrot.slane %v470, 2
      %v472 = vadd.f32 %v470, %v471
      %v473 = vrot.slane %v472, 1
      %v474 = vadd.f32 %v472, %v473
      %v475 = vlaneseq
      %v476 = vshrl.u32 %v475, 7
      %vm477 = vcmp.eq.s32.totalorder %v476, 0
      %vm478 = vcmp.eq.s32.totalorder %v476, 1
      %v479 = vsel %vm478, %v474, 0.0
      %v480 = vsel %vm477, %v437, %v479
      %481 = vst [vmem:[%s184] sm:$0xff] %v480
      %s482 = smul.u32 16, %s15
      %p483 = scmp.lt.s32.totalorder %s482, 31
      %s484 = scalar_select %p483, %s482, 31
      %s485 = smul.addr %s484, 8
      %s486 = scalar_lea.vmem %s2, %s485
      %p487 = scmp.lt.s32.totalorder %s15, 1
      %s488 = scalar_select %p487, %s15, 1
      %s489 = smul.addr %s488, 8
      %s490 = scalar_lea.vmem %s3, %s489
      // Predicated region
      $region29: #{ad2_forward.2} parent=27 // pred_check
        %p491 = pneg %p80
      $region30: #{ad2_forward.2} parent=27 // pred_check_branch
        %493 = sbr.rel (%p491) target = $region32
      $region31: #{ad2_forward.2} parent=27 // pred_region
        %s494 = smul.u32 16, %s15
      $region32: #{ad2_forward.2} parent=27 // pred_fallthru
        _
      // Predicated region
      $region33: #{ad2_forward.2} parent=27 // pred_check
        %p495 = pneg %p106
      $region34: #{ad2_forward.2} parent=27 // pred_check_branch
        %497 = sbr.rel (%p495) target = $region36
      $region35: #{ad2_forward.2} parent=27 // pred_region
        _
      $region36: #{ad2_forward.2} parent=27 // pred_fallthru
        _
    $region28: #{ad2_forward.2} parent=5 // pred_fallthru
      _
    %p498 = scmp.le.s32.totalorder 2, %s10
    // Predicated region
    $region37: #{ad2_forward.2} parent=5 // pred_check
      %p499 = pneg %p498
    $region38: #{ad2_forward.2} parent=5 // pred_check_branch
      %501 = sbr.rel (%p499) target = $region40
    $region39: #{ad2_forward.2} parent=5 // pred_region
      %s502 = ssub.s32 %s10, 2
      // Predicated region
      $region41: #{ad2_forward.2} parent=39 // pred_check
        %p503 = pneg %p86
      $region42: #{ad2_forward.2} parent=39 // pred_check_branch
        %505 = sbr.rel (%p503) target = $region44
      $region43: #{ad2_forward.2} parent=39 // pred_region
        %s506 = smul.u32 16, %s16
        %p507 = scmp.lt.s32.totalorder %s506, 31
        %s508 = scalar_select %p507, %s506, 31
        %s509 = smul.addr %s508, 8
        %s510 = scalar_lea.vmem %s2, %s509
      $region44: #{ad2_forward.2} parent=39 // pred_fallthru
        _
      // Predicated region
      $region45: #{ad2_forward.2} parent=39 // pred_check
        %p511 = pneg %p112
      $region46: #{ad2_forward.2} parent=39 // pred_check_branch
        %513 = sbr.rel (%p511) target = $region48
      $region47: #{ad2_forward.2} parent=39 // pred_region
        %p514 = scmp.lt.s32.totalorder %s16, 1
        %s515 = scalar_select %p514, %s16, 1
        %s516 = smul.addr %s515, 8
        %s517 = scalar_lea.vmem %s3, %s516
      $region48: #{ad2_forward.2} parent=39 // pred_fallthru
        _
    $region40: #{ad2_forward.2} parent=5 // pred_fallthru
      _
  $region6: #{ad2_forward.2} parent=0 // loop_footer
    %s14 = sadd.s32 1, %s10
  $region7: #{ad2_forward.2} parent=0 // loop_footer_branch
    %9 = sbr.rel target = $region3
  $region8: #{ad2_forward.2} parent=0 // loop_exit
    _

</llo_original>
